<compile_context>
chip_gen: v7x
topology: tpu7x:2x2x1
jax: 0.10.0
libtpu: 0.0.40
codegen_flags: <defaults>
</compile_context>

<pallas_src>
import jax
import jax.numpy as jnp
import numpy as np
from jax.experimental import pallas as pl
from jax.experimental.pallas import tpu as pltpu


LN_EPS = 1e-5  # PyTorch nn.LayerNorm default


def _edge_decoder_kernel(hfT_ref, featT_ref, w1T_ref, psl_ref, out_ref):
    # small-param slab psl (H, 16) column layout (see wrapper):
    #   0: w1 col for cont_oscore   1: w1 col for bin_oscore
    #   2: w1 col for pscore        3: b1
    #   4..7: zeros (pad rows of the score tile)
    #   8: gamma * w2 (LN affine folded into lin2)
    #   9: [b2 + sum(beta*w2), 0, ...]   10..15: zeros
    f = featT_ref[...]                       # (8, TE) per-edge scalar features
    offb_r = f[0:1, :]                       # onset_beat[row] + duration_beat[row]
    ob_c = f[1:2, :]                         # onset_beat[col]
    ts_c = f[2:3, :]                         # ts_beats[col]
    off_r = f[3:4, :]                        # onsets[row] + durations[row]
    on_c = f[4:5, :]                         # onsets[col]
    p_r = f[5:6, :]                          # pitches[row]
    p_c = f[6:7, :]                          # pitches[col]

    # onset / pitch scores, (1, TE) lane-dense rows
    cont = 1.0 - jnp.tanh((ob_c - offb_r) / ts_c)
    binr = (on_c == off_r).astype(jnp.float32)
    psc = jnp.abs(p_c - p_r) * (1.0 / 127.0)
    ones = jnp.ones_like(cont)
    zeros4 = jnp.zeros((4, cont.shape[1]), jnp.float32)
    scores = jnp.concatenate([cont, binr, psc, ones, zeros4], axis=0)  # (8, TE)

    psl = psl_ref[...]                       # (H, 16) f32

    # lin1 on the MXU: hf part (bf16/f32 operands, f32 accumulation) plus the
    # score/bias part as a second small (H,8)@(8,TE) matmul (idle-MXU offload
    # of the former VPU broadcast-MACs; b1 rides on the "ones" row).
    h = jnp.dot(w1T_ref[...], hfT_ref[...],
                preferred_element_type=jnp.float32)               # (H, TE)
    h = h + jnp.dot(psl[:, 0:8], scores,
                    preferred_element_type=jnp.float32)
    h = jnp.maximum(h, 0.0)                  # relu

    # dropout = identity at inference time
    # TODO(synk): training-mode dropout (stateful PRNG mask) not implemented.

    # LayerNorm over hidden channels (sublane axis), two-pass (centered)
    # statistics to match the PyTorch reference numerics.
    inv_h = 1.0 / h.shape[0]
    mean = jnp.sum(h, axis=0, keepdims=True) * inv_h              # (1, TE)
    d = h - mean
    var = jnp.sum(d * d, axis=0, keepdims=True) * inv_h
    hn = d * jax.lax.rsqrt(var + LN_EPS)

    # lin2 with LN affine folded in: sum(hn * (gamma*w2)) + (b2 + sum(beta*w2))
    out = jnp.sum(hn * psl[:, 8:9], axis=0, keepdims=True)        # (1, TE)
    out_ref[...] = out + psl[0:1, 9:10]


def edge_decoder_pallas(params, hidden_features, pot_edges, onsets, durations,
                        pitches, onset_beat, duration_beat, ts_beats,
                        *, tile_edges=8192, hf_dtype=jnp.bfloat16):
    """Pallas implementation of EdgeDecoder.forward (staff_feedback=False).

    hf_dtype=bfloat16 (default, production path) halves the dominant HBM
    stream and feeds the MXU bf16 directly; it matches the f32 reference only
    to ~5e-2.  Pass hf_dtype=jnp.float32 for bit-comparable results.
    """
    H = params["gamma"].shape[0]
    row, col = pot_edges[0], pot_edges[1]
    E = row.shape[0]
    if E == 0:                                # guard: empty edge set
        return jnp.zeros((0,), jnp.float32)

    # Edge tile: large tiles amortise the ~0.35 us per-grid-step overhead; at
    # H=32 one TE=8192 step is < ~3 MiB double-buffered (bf16 hf), well inside
    # every generation's scoped-VMEM default.  Clamp to the 128-rounded edge
    # count so tiny problems do not over-pad.
    tile_edges = max(128, (tile_edges // 128) * 128)
    TE = min(tile_edges, ((E + 127) // 128) * 128)
    Ep = ((E + TE - 1) // TE) * TE
    pad = Ep - E
    n_tiles = Ep // TE

    # --- glue: node-level precompute + per-edge gathers (plain JAX) ---------
    # TODO(synk): move the row/col gathers in-kernel (scalar-prefetched indices
    # + resident node table in VMEM) to avoid materialising the gathered slab
    # in HBM; kept in the wrapper for lowering robustness.
    offset_beat = onset_beat + duration_beat
    offset = onsets + durations

    # Transpose the small (N, H) node table once, then gather columns so the
    # big per-edge slab is produced directly in (2H, E) layout.
    hfT = hidden_features.T                                        # (H, N)
    hfrc_T = jnp.concatenate([hfT[:, row], hfT[:, col]], axis=0)   # (2H, E)
    hfrc_T = jnp.pad(hfrc_T, ((0, 0), (0, pad))).astype(hf_dtype)  # (2H, Ep)

    feat_T = jnp.stack(
        [offset_beat[row], onset_beat[col], ts_beats[col],
         offset[row], onsets[col], pitches[row], pitches[col]],
        axis=0).astype(jnp.float32)                                # (7, E)
    feat_T = jnp.pad(feat_T, ((0, 1), (0, pad)))                   # (8, Ep)
    feat_T = feat_T.at[2, E:].set(1.0)          # safe ts for padded edges

    # --- weights: transpose, fold LN affine into lin2, pack smalls ----------
    w1 = params["w1"].astype(jnp.float32)       # (2H+3, H)
    w1_rc_T = jnp.transpose(w1[:2 * H, :]).astype(hf_dtype)        # (H, 2H)
    w1_sc_T = jnp.transpose(w1[2 * H:, :])      # (H, 3): cont, bin, pscore
    b1 = params["b1"].reshape(H, 1)
    gamma = params["gamma"].reshape(H, 1)
    beta = params["beta"].reshape(H, 1)
    w2 = params["w2"].reshape(H, 1)
    gw = gamma * w2                             # LN gamma folded into lin2
    b2p = params["b2"].reshape(()) + jnp.sum(beta * w2)   # LN beta folded
    b2_col = jnp.zeros((H, 1), jnp.float32).at[0, 0].set(b2p)
    psl = jnp.concatenate(
        [w1_sc_T, b1,
         jnp.zeros((H, 4), jnp.float32),        # pad cols for the 8-row scores
         gw, b2_col,
         jnp.zeros((H, 6), jnp.float32)], axis=1).astype(jnp.float32)  # (H,16)

    hf_bytes = 2 * H * Ep * jnp.dtype(hf_dtype).itemsize
    cost = pl.CostEstimate(
        flops=2 * Ep * H * (2 * H + 8) + 10 * Ep * H,
        transcendentals=2 * Ep,
        bytes_accessed=hf_bytes + 8 * Ep * 4 + Ep * 4
        + 2 * H * H * jnp.dtype(hf_dtype).itemsize + 16 * H * 4,
    )

    out = pl.pallas_call(
        _edge_decoder_kernel,
        out_shape=jax.ShapeDtypeStruct((1, Ep), jnp.float32),
        grid_spec=pltpu.PrefetchScalarGridSpec(
            num_scalar_prefetch=0,
            grid=(n_tiles,),
            in_specs=[
                pl.BlockSpec((2 * H, TE), lambda i: (0, i)),   # [hf_r; hf_c]^T
                pl.BlockSpec((8, TE), lambda i: (0, i)),       # edge scalars^T
                pl.BlockSpec((H, 2 * H), lambda i: (0, 0)),    # w1 (hf part)^T
                pl.BlockSpec((H, 16), lambda i: (0, 0)),       # packed smalls
            ],
            out_specs=pl.BlockSpec((1, TE), lambda i: (0, i)),
        ),
        # TODO(synk): on v7x, verify the edge axis shards across both
        # TensorCores; if not, switch this axis to pltpu.CORE_PARALLEL.
        compiler_params=pltpu.CompilerParams(
            dimension_semantics=("parallel",)),
        cost_estimate=cost,
    )(hfrc_T, feat_T, w1_rc_T, psl)

    return out.reshape(Ep)[:E]                                   # .view(-1)


def edge_decoder_ref(params, hidden_features, pot_edges, onsets, durations,
                     pitches, onset_beat, duration_beat, ts_beats):
    """Pure-JAX reference mirroring the PyTorch forward (eval mode)."""
    row, col = pot_edges[0], pot_edges[1]
    offset_beat = onset_beat + duration_beat
    nd = onset_beat[col] - offset_beat[row]
    cont = 1.0 - jnp.tanh(nd / ts_beats[col])
    offset = onsets + durations
    binary = (onsets[col] == offset[row]).astype(jnp.float32)
    oscore = jnp.stack([cont, binary], axis=-1)
    pscore = (jnp.abs(pitches[col] - pitches[row]) / 127.0)[:, None]
    z = jnp.concatenate(
        [hidden_features[row], hidden_features[col], oscore, pscore], axis=-1)
    z = jnp.maximum(z @ params["w1"] + params["b1"], 0.0)
    mean = jnp.mean(z, axis=-1, keepdims=True)
    var = jnp.mean((z - mean) ** 2, axis=-1, keepdims=True)
    z = (z - mean) * jax.lax.rsqrt(var + LN_EPS)
    z = z * params["gamma"] + params["beta"]
    z = z @ params["w2"] + params["b2"]
    return z.reshape(-1)


def init_params(key, hidden_channels, mult_factor=1, staff_feedback=False):
    input_dim = 2 * hidden_channels * mult_factor + 3
    if staff_feedback:
        input_dim += 4
    k1, k2, k3, k4 = jax.random.split(key, 4)
    s1 = 1.0 / np.sqrt(input_dim)
    s2 = 1.0 / np.sqrt(hidden_channels)
    return {
        "w1": jax.random.uniform(k1, (input_dim, hidden_channels),
                                 jnp.float32, -s1, s1),
        "b1": jax.random.uniform(k2, (hidden_channels,), jnp.float32, -s1, s1),
        "w2": jax.random.uniform(k3, (hidden_channels, 1),
                                 jnp.float32, -s2, s2),
        "b2": jax.random.uniform(k4, (1,), jnp.float32, -s2, s2),
        "gamma": jnp.ones((hidden_channels,), jnp.float32),
        "beta": jnp.zeros((hidden_channels,), jnp.float32),
    }


def _make_inputs(key, N, E, H):
    keys = jax.random.split(key, 10)
    params = init_params(keys[0], H)
    hidden_features = jax.random.normal(keys[1], (N, H), jnp.float32)
    row = jax.random.randint(keys[2], (E,), 0, N)
    col = jax.random.randint(keys[3], (E,), 0, N)
    pot_edges = jnp.stack([row, col], axis=0)
    onsets = jnp.floor(jax.random.uniform(keys[4], (N,), jnp.float32, 0., 8.))
    durations = jnp.floor(
        jax.random.uniform(keys[5], (N,), jnp.float32, 1., 4.))
    pitches = jnp.floor(
        jax.random.uniform(keys[6], (N,), jnp.float32, 40., 90.))
    onset_beat = onsets * 0.5
    duration_beat = durations * 0.5
    ts_beats = jnp.full((N,), 4.0, jnp.float32)
    return (params, hidden_features, pot_edges, onsets, durations, pitches,
            onset_beat, duration_beat, ts_beats)


if __name__ == "__main__":
    key = jax.random.PRNGKey(0)
    H = 32          # hidden_channels

    # Small case: N=16 nodes, E=40 potential edges (single tile + padding).
    args_small = _make_inputs(key, N=16, E=40, H=H)
    # Slightly larger case exercises multiple grid tiles + tail padding.
    args_multi = _make_inputs(jax.random.PRNGKey(1), N=64, E=300, H=H)

    for args in (args_small, args_multi):
        # f32 hf path: tight check against the pure-JAX / PyTorch-equivalent
        # reference.
        out_f32 = jax.block_until_ready(
            edge_decoder_pallas(*args, tile_edges=128, hf_dtype=jnp.float32))
        # bf16 hf path (production default): halves the dominant HBM stream,
        # tolerance documented at ~5e-2.
        out_bf16 = jax.block_until_ready(
            edge_decoder_pallas(*args, hf_dtype=jnp.bfloat16))

        ref = edge_decoder_ref(*args)
        np.testing.assert_allclose(np.asarray(out_f32), np.asarray(ref),
                                   rtol=1e-4, atol=1e-4)
        np.testing.assert_allclose(np.asarray(out_bf16), np.asarray(ref),
                                   rtol=5e-2, atol=5e-2)

    print("KERNEL_OK")
</pallas_src>

<mosaic_0001>
module attributes {stable_mosaic.version = 11 : i64} {
  func.func @_edge_decoder_kernel(%arg0: i32, %arg1: memref<64x128xf32, #tpu.memory_space<vmem>>, %arg2: memref<8x128xf32, #tpu.memory_space<vmem>>, %arg3: memref<32x64xf32, #tpu.memory_space<vmem>>, %arg4: memref<32x16xf32, #tpu.memory_space<vmem>>, %arg5: memref<1x128xf32, #tpu.memory_space<vmem>>) attributes {dimension_semantics = [#tpu.dimension_semantics<parallel>], iteration_bounds = array<i64: 1>, scalar_prefetch = 0 : i64, scratch_operands = 0 : i64, tpu.core_type = #tpu.core_type<tc>, window_params = [{transform_indices = @transform_0, window_bounds = array<i64: 64, 128>}, {transform_indices = @transform_1, window_bounds = array<i64: 8, 128>}, {pipeline_mode = #tpu.pipeline_mode<synchronous>, transform_indices = @transform_2, window_bounds = array<i64: 32, 64>}, {pipeline_mode = #tpu.pipeline_mode<synchronous>, transform_indices = @transform_3, window_bounds = array<i64: 32, 16>}, {transform_indices = @transform_4, window_bounds = array<i64: 1, 128>}]} {
    %c0 = arith.constant 0 : index
    %c0_0 = arith.constant 0 : index
    %0 = vector.load %arg2[%c0, %c0_0] : memref<8x128xf32, #tpu.memory_space<vmem>>, vector<8x128xf32>
    %1 = vector.extract_strided_slice %0 {offsets = [0, 0], sizes = [1, 128], strides = [1, 1]} : vector<8x128xf32> to vector<1x128xf32>
    %2 = vector.extract_strided_slice %0 {offsets = [1, 0], sizes = [1, 128], strides = [1, 1]} : vector<8x128xf32> to vector<1x128xf32>
    %3 = vector.extract_strided_slice %0 {offsets = [2, 0], sizes = [1, 128], strides = [1, 1]} : vector<8x128xf32> to vector<1x128xf32>
    %4 = vector.extract_strided_slice %0 {offsets = [3, 0], sizes = [1, 128], strides = [1, 1]} : vector<8x128xf32> to vector<1x128xf32>
    %5 = vector.extract_strided_slice %0 {offsets = [4, 0], sizes = [1, 128], strides = [1, 1]} : vector<8x128xf32> to vector<1x128xf32>
    %6 = vector.extract_strided_slice %0 {offsets = [5, 0], sizes = [1, 128], strides = [1, 1]} : vector<8x128xf32> to vector<1x128xf32>
    %7 = vector.extract_strided_slice %0 {offsets = [6, 0], sizes = [1, 128], strides = [1, 1]} : vector<8x128xf32> to vector<1x128xf32>
    %8 = arith.subf %2, %1 : vector<1x128xf32>
    %9 = arith.divf %8, %3 : vector<1x128xf32>
    %10 = math.tanh %9 : vector<1x128xf32>
    %cst = arith.constant 1.000000e+00 : f32
    %11 = vector.broadcast %cst : f32 to vector<1x128xf32>
    %12 = arith.subf %11, %10 : vector<1x128xf32>
    %13 = arith.cmpf oeq, %5, %4 : vector<1x128xf32>
    %14 = arith.extui %13 : vector<1x128xi1> to vector<1x128xi32>
    %15 = arith.sitofp %14 : vector<1x128xi32> to vector<1x128xf32>
    %16 = arith.subf %7, %6 : vector<1x128xf32>
    %17 = math.absf %16 : vector<1x128xf32>
    %cst_1 = arith.constant 0.00787401571 : f32
    %18 = vector.broadcast %cst_1 : f32 to vector<1x128xf32>
    %19 = arith.mulf %17, %18 : vector<1x128xf32>
    %cst_2 = arith.constant 1.000000e+00 : f32
    %20 = vector.broadcast %cst_2 : f32 to vector<1x128xf32>
    %cst_3 = arith.constant 0.000000e+00 : f32
    %21 = vector.broadcast %cst_3 : f32 to vector<4x128xf32>
    %22 = tpu.concatenate %12, %15, %19, %20, %21 in 0 : vector<1x128xf32>, vector<1x128xf32>, vector<1x128xf32>, vector<1x128xf32>, vector<4x128xf32> -> vector<8x128xf32>
    %c0_4 = arith.constant 0 : index
    %c0_5 = arith.constant 0 : index
    %23 = vector.load %arg4[%c0_4, %c0_5] : memref<32x16xf32, #tpu.memory_space<vmem>>, vector<32x16xf32>
    %c0_6 = arith.constant 0 : index
    %c0_7 = arith.constant 0 : index
    %24 = vector.load %arg3[%c0_6, %c0_7] : memref<32x64xf32, #tpu.memory_space<vmem>>, vector<32x64xf32>
    %c0_8 = arith.constant 0 : index
    %c0_9 = arith.constant 0 : index
    %25 = vector.load %arg1[%c0_8, %c0_9] : memref<64x128xf32, #tpu.memory_space<vmem>>, vector<64x128xf32>
    %cst_10 = arith.constant dense<0.000000e+00> : vector<32x128xf32>
    %26 = tpu.matmul %24, %25, %cst_10 {dimension_numbers = #tpu.dot_dimension_numbers<[1], [0], [0], [1], [0, 0, 1, 1], [], []>} : vector<32x64xf32>, vector<64x128xf32>, vector<32x128xf32> -> vector<32x128xf32>
    %27 = vector.extract_strided_slice %23 {offsets = [0, 0], sizes = [32, 8], strides = [1, 1]} : vector<32x16xf32> to vector<32x8xf32>
    %cst_11 = arith.constant dense<0.000000e+00> : vector<32x128xf32>
    %28 = tpu.matmul %27, %22, %cst_11 {dimension_numbers = #tpu.dot_dimension_numbers<[1], [0], [0], [1], [0, 0, 1, 1], [], []>} : vector<32x8xf32>, vector<8x128xf32>, vector<32x128xf32> -> vector<32x128xf32>
    %29 = arith.addf %26, %28 : vector<32x128xf32>
    %cst_12 = arith.constant 0.000000e+00 : f32
    %30 = vector.broadcast %cst_12 : f32 to vector<32x128xf32>
    %31 = arith.maximumf %29, %30 : vector<32x128xf32>
    %cst_13 = arith.constant dense<0.000000e+00> : vector<128xf32>
    %32 = vector.multi_reduction <add>, %31, %cst_13 [0] : vector<32x128xf32> to vector<128xf32>
    %33 = vector.shape_cast %32 : vector<128xf32> to vector<1x128xf32>
    %cst_14 = arith.constant 3.125000e-02 : f32
    %34 = vector.broadcast %cst_14 : f32 to vector<1x128xf32>
    %35 = arith.mulf %33, %34 : vector<1x128xf32>
    %36 = vector.broadcast %35 : vector<1x128xf32> to vector<32x128xf32>
    %37 = arith.subf %31, %36 : vector<32x128xf32>
    %38 = arith.mulf %37, %37 : vector<32x128xf32>
    %cst_15 = arith.constant dense<0.000000e+00> : vector<128xf32>
    %39 = vector.multi_reduction <add>, %38, %cst_15 [0] : vector<32x128xf32> to vector<128xf32>
    %40 = vector.shape_cast %39 : vector<128xf32> to vector<1x128xf32>
    %cst_16 = arith.constant 3.125000e-02 : f32
    %41 = vector.broadcast %cst_16 : f32 to vector<1x128xf32>
    %42 = arith.mulf %40, %41 : vector<1x128xf32>
    %cst_17 = arith.constant 9.99999974E-6 : f32
    %43 = vector.broadcast %cst_17 : f32 to vector<1x128xf32>
    %44 = arith.addf %42, %43 : vector<1x128xf32>
    %45 = math.rsqrt %44 : vector<1x128xf32>
    %46 = vector.broadcast %45 : vector<1x128xf32> to vector<32x128xf32>
    %47 = arith.mulf %37, %46 : vector<32x128xf32>
    %48 = vector.extract_strided_slice %23 {offsets = [0, 8], sizes = [32, 1], strides = [1, 1]} : vector<32x16xf32> to vector<32x1xf32>
    %49 = vector.broadcast %48 : vector<32x1xf32> to vector<32x128xf32>
    %50 = arith.mulf %47, %49 : vector<32x128xf32>
    %cst_18 = arith.constant dense<0.000000e+00> : vector<128xf32>
    %51 = vector.multi_reduction <add>, %50, %cst_18 [0] : vector<32x128xf32> to vector<128xf32>
    %52 = vector.shape_cast %51 : vector<128xf32> to vector<1x128xf32>
    %53 = vector.extract_strided_slice %23 {offsets = [0, 9], sizes = [1, 1], strides = [1, 1]} : vector<32x16xf32> to vector<1x1xf32>
    %54 = vector.broadcast %53 : vector<1x1xf32> to vector<1x128xf32>
    %55 = arith.addf %52, %54 : vector<1x128xf32>
    %c0_19 = arith.constant 0 : index
    %c0_20 = arith.constant 0 : index
    %56 = vector.load %arg5[%c0_19, %c0_20] : memref<1x128xf32, #tpu.memory_space<vmem>>, vector<1x128xf32>
    tpu.vector_store %arg5[%c0_19, %c0_20], %55 {strides = array<i32>} : memref<1x128xf32, #tpu.memory_space<vmem>>, vector<1x128xf32>,
    return
  }
  func.func @transform_0(%arg0: i32) -> (i32, i32) {
    %c0_i32 = arith.constant 0 : i32
    %c0_i32_0 = arith.constant 0 : i32
    return %c0_i32, %arg0 : i32, i32
  }
  func.func @transform_1(%arg0: i32) -> (i32, i32) {
    %c0_i32 = arith.constant 0 : i32
    %c0_i32_0 = arith.constant 0 : i32
    return %c0_i32, %arg0 : i32, i32
  }
  func.func @transform_2(%arg0: i32) -> (i32, i32) {
    %c0_i32 = arith.constant 0 : i32
    %c0_i32_0 = arith.constant 0 : i32
    %c0_i32_1 = arith.constant 0 : i32
    return %c0_i32, %c0_i32_0 : i32, i32
  }
  func.func @transform_3(%arg0: i32) -> (i32, i32) {
    %c0_i32 = arith.constant 0 : i32
    %c0_i32_0 = arith.constant 0 : i32
    %c0_i32_1 = arith.constant 0 : i32
    return %c0_i32, %c0_i32_0 : i32, i32
  }
  func.func @transform_4(%arg0: i32) -> (i32, i32) {
    %c0_i32 = arith.constant 0 : i32
    %c0_i32_0 = arith.constant 0 : i32
    return %c0_i32, %arg0 : i32, i32
  }
}

</mosaic_0001>

<llo_original>
// kernel: tpu_custom_call.1
$region0: #{tpu_custom_call.1}
  #allocation0 [shape = 'u32[]', space=smem, size = 0x4, offset = 0x4, fixed_abs, tag = 'smem constant byte address 0x4 - core index']
  #allocation1 [shape = 'u32[144,128]{1,0:T(1,128)}', space=vmem, size = 0x12000, scoped, tag = 'internal scratch']
  %s0 = inlined_call_operand.hbm [shape: f32[64,128], index: 0, kind: input, shape index: {}]
  %s1 = inlined_call_operand.vmem [shape: f32[8,128], index: 1, kind: input, shape index: {}]
  %s2 = inlined_call_operand.vmem [shape: f32[32,64], index: 2, kind: input, shape index: {}]
  %s3 = inlined_call_operand.vmem [shape: f32[32,16], index: 3, kind: input, shape index: {}]
  %s4 = inlined_call_operand.hbm [shape: f32[1,128], index: 4, kind: output, shape index: {}]
  %s5 = sld [smem:[#allocation0]]
  $region30: #{tpu_custom_call.1} parent=0
    _
  %s7 = ssub.s32 1, %s5
  %s8 = scalar_select 0, %s7, %s5
  $region1: #{tpu_custom_call.1} parent=0
    #allocation2 [shape = 'u8[32768]{0}', space=vmem, size = 0x8000, scoped, tag = 'input window, operand 0, single buffered']
    #allocation3 [shape = 's32[1]{0}', space=sflag, size = 0x4, scoped, tag = 'scoped memory for tpu_custom_call.1']
    #allocation4 [shape = 's32[1]{0}', space=sflag, size = 0x4, scoped, tag = 'scoped memory for tpu_custom_call.1']
    #allocation5 [shape = 'u8[512]{0}', space=vmem, size = 0x400, scoped, tag = 'output window, operand 0, single buffered']
    %9 = vsyncpa [#allocation3], 0
    %10 = vsyncpa [#allocation4], 0
    // Predicated region
    $region2: #{tpu_custom_call.1} parent=1 // pred_check
      _
    $region3: #{tpu_custom_call.1} parent=1 // pred_check_branch
      %12 = sbr.rel (0) target = $region5
    $region4: #{tpu_custom_call.1} parent=1 // pred_region
      %s14 = ssub.s32 1024, 1024
      %15 = vsyncadd [#allocation3], %s14
      %s16 = sshll.u32 [#allocation2], 4
      %s17 = int_to_ptr.vmem [resolvable:$true] %s16
      %22 = dma.hbm_to_vmem [thread:$0]  %s0, 1024, %s17, [#allocation3], 128, 128, 8
    $region5: #{tpu_custom_call.1} parent=1 // pred_fallthru
      _
    // Predicated region
    $region6: #{tpu_custom_call.1} parent=1 // pred_check
      _
    $region7: #{tpu_custom_call.1} parent=1 // pred_check_branch
      %24 = sbr.rel (0) target = $region9
    $region8: #{tpu_custom_call.1} parent=1 // pred_region
      _
    $region9: #{tpu_custom_call.1} parent=1 // pred_fallthru
      _
    // Predicated region
    $region10: #{tpu_custom_call.1} parent=1 // pred_check
      _
    $region11: #{tpu_custom_call.1} parent=1 // pred_check_branch
      %26 = sbr.rel (0) target = $region13
    $region12: #{tpu_custom_call.1} parent=1 // pred_region
      _
    $region13: #{tpu_custom_call.1} parent=1 // pred_fallthru
      _
    // Predicated region
    $region14: #{tpu_custom_call.1} parent=1 // pred_check
      _
    $region15: #{tpu_custom_call.1} parent=1 // pred_check_branch
      %28 = sbr.rel (0) target = $region17
    $region16: #{tpu_custom_call.1} parent=1 // pred_region
      _
    $region17: #{tpu_custom_call.1} parent=1 // pred_fallthru
      _
    // Predicated region
    $region18: #{tpu_custom_call.1} parent=1 // pred_check
      _
    $region19: #{tpu_custom_call.1} parent=1 // pred_check_branch
      %30 = sbr.rel (0) target = $region21
    $region20: #{tpu_custom_call.1} parent=1 // pred_region
      %31 = dma.done [#allocation3], 1024
    $region21: #{tpu_custom_call.1} parent=1 // pred_fallthru
      _
    %v32 = vld [vmem:[%s1] sm:$0xff]
    %v34 = vrot.slane %v32, 7
    %v36 = vsub.f32 %v32, %v34
    %v37 = vrot.slane %v32, 1
    %v39 = vrcp.pop %v37
    %v40 = vmul.f32 %v36, %v39
    %v41 = vtanh.pop %v40
    %v42 = vsub.f32 1.0, %v41
    %vm43 = vcmp.eq.f32.partialorder %v32, %v34
    %v44 = vsel %vm43, 1, 0
    %v45 = vcvt.s32.f32 %v44
    %v46 = vand.u32 2147483647, %v36
    %v47 = vmul.f32 %v46, 0.007874016
    %v49 = vrot.slane %v42, 1
    %v52 = vrot.slane %v45, 3
    %v55 = vrot.slane %v47, 4
    %vm57 = vcmask 1040384
    %v58 = vsel %vm57, %v49, %v52
    %vm59 = vcmask 1041408
    %v60 = vsel %vm59, %v58, %v55
    %vm61 = vcmask 1042432
    %v62 = vsel %vm61, %v60, 1.0
    %vm63 = vcmask 1043456
    %v64 = vsel %vm63, %v62, 0.0
    %v65 = vld [vmem:[%s3] sm:$0xff]
    %v66 = vld [vmem:[%s3 + $0x8] sm:$0xff]
    %v67 = vld [vmem:[%s3 + $0x10] sm:$0xff]
    %v68 = vld [vmem:[%s3 + $0x18] sm:$0xff]
    %v69 = vld [vmem:[%s2] sm:$0xff]
    %v70 = vld [vmem:[%s2 + $0x8] sm:$0xff]
    %v71 = vld [vmem:[%s2 + $0x10] sm:$0xff]
    %v72 = vld [vmem:[%s2 + $0x18] sm:$0xff]
    %v73 = vld [vmem:[#allocation2] sm:$0xff]
    %v74 = vld [vmem:[#allocation2 + $0x8] sm:$0xff]
    %v75 = vld [vmem:[#allocation2 + $0x10] sm:$0xff]
    %v76 = vld [vmem:[#allocation2 + $0x18] sm:$0xff]
    %v77 = vld [vmem:[#allocation2 + $0x20] sm:$0xff]
    %v78 = vld [vmem:[#allocation2 + $0x28] sm:$0xff]
    %v79 = vld [vmem:[#allocation2 + $0x30] sm:$0xff]
    %v80 = vld [vmem:[#allocation2 + $0x38] sm:$0xff]
    %vm81 = vcmask 64512
    %v83 = vsel %vm81, %v65, 0
    %v86 = vsel %vm81, %v66, 0
    %v89 = vsel %vm81, %v67, 0
    %v92 = vsel %vm81, %v68, 0
    %94 = vmatprep.subr.mxu0 0.0
    %95 = vmatpush1.msra.mxu0 %v64
    %96 = vmatprep.subr.mxu0 0.0
    %97 = vmatpush1.msra.mxu0 0.0
    %98 = vmatprep.subr.mxu0 0.0
    %99 = vmatpush1.msra.mxu0 0.0
    %100 = vmatprep.subr.mxu0 0.0
    %101 = vmatpush1.msra.mxu0 0.0
    %102 = vmatprep.subr.mxu0 0.0
    %103 = vmatpush1.msra.mxu0 0.0
    %104 = vmatprep.subr.mxu0 0.0
    %105 = vmatpush1.msra.mxu0 0.0
    %106 = vmatprep.subr.mxu0 0.0
    %107 = vmatpush1.msra.mxu0 0.0
    %108 = vmatprep.subr.mxu0 0.0
    %109 = vmatpush1.msra.mxu0 0.0
    %110 = vmatprep.subr.mxu0 0.0
    %111 = vmatpush1.msra.mxu0 0.0
    %112 = vmatprep.subr.mxu0 0.0
    %113 = vmatpush1.msra.mxu0 0.0
    %114 = vmatprep.subr.mxu0 0.0
    %115 = vmatpush1.msra.mxu0 0.0
    %116 = vmatprep.subr.mxu0 0.0
    %117 = vmatpush1.msra.mxu0 0.0
    %118 = vmatprep.subr.mxu0 0.0
    %119 = vmatpush1.msra.mxu0 0.0
    %120 = vmatprep.subr.mxu0 0.0
    %121 = vmatpush1.msra.mxu0 0.0
    %122 = vmatprep.subr.mxu0 0.0
    %123 = vmatpush1.msra.mxu0 0.0
    %124 = vmatprep.subr.mxu0 0.0
    %125 = vmatpush1.msra.mxu0 0.0
    %126 = vmatprep.subr.mxu0 0.0
    %127 = vmatpush1.msra.mxu0 0.0
    %128 = vmatprep.subr.mxu0 0.0
    %129 = vmatpush1.msra.mxu0 0.0
    %130 = vmatprep.subr.mxu0 0.0
    %131 = vmatpush1.msra.mxu0 0.0
    %132 = vmatprep.subr.mxu0 0.0
    %133 = vmatpush1.msra.mxu0 0.0
    %134 = vmatprep.subr.mxu0 0.0
    %135 = vmatpush1.msra.mxu0 0.0
    %136 = vmatprep.subr.mxu0 0.0
    %137 = vmatpush1.msra.mxu0 0.0
    %138 = vmatprep.subr.mxu0 0.0
    %139 = vmatpush1.msra.mxu0 0.0
    %140 = vmatprep.subr.mxu0 0.0
    %141 = vmatpush1.msra.mxu0 0.0
    %142 = vmatprep.subr.mxu0 0.0
    %143 = vmatpush1.msra.mxu0 0.0
    %144 = vmatprep.subr.mxu0 0.0
    %145 = vmatpush1.msra.mxu0 0.0
    %146 = vmatprep.subr.mxu0 0.0
    %147 = vmatpush1.msra.mxu0 0.0
    %148 = vmatprep.subr.mxu0 0.0
    %149 = vmatpush1.msra.mxu0 0.0
    %150 = vmatprep.subr.mxu0 0.0
    %151 = vmatpush1.msra.mxu0 0.0
    %152 = vmatprep.subr.mxu0 0.0
    %153 = vmatpush1.msra.mxu0 0.0
    %154 = vmatprep.subr.mxu0 0.0
    %155 = vmatpush1.msra.mxu0 0.0
    %156 = vmatprep.subr.mxu0 0.0
    %157 = vmatpush1.msra.mxu0 0.0
    %158 = vmatprep.mubr.f32.mxu0 0.0
    %159 = vmatmul.mubr.f32.gmra.mrb[0].mxu0 %v83
    %v160 = vpop.f32.mrb[0].mxu0
    %v161 = vadd.f32 0.0, %v160
    %v162 = vpop.f32.mrb[0].mxu0
    %163 = vmatprep.mubr.f32.mxu0 0.0
    %164 = vmatmul.mubr.f32.gmra.mrb[0].mxu0 %v86
    %v165 = vpop.f32.mrb[0].mxu0
    %v166 = vadd.f32 0.0, %v165
    %v167 = vpop.f32.mrb[0].mxu0
    %168 = vmatprep.mubr.f32.mxu0 0.0
    %169 = vmatmul.mubr.f32.gmra.mrb[0].mxu0 %v89
    %v170 = vpop.f32.mrb[0].mxu0
    %v171 = vadd.f32 0.0, %v170
    %v172 = vpop.f32.mrb[0].mxu0
    %173 = vmatprep.mubr.f32.mxu0 0.0
    %174 = vmatmul.mubr.f32.gmra.mrb[0].mxu0 %v92
    %v175 = vpop.f32.mrb[0].mxu0
    %v176 = vadd.f32 0.0, %v175
    %v177 = vpop.f32.mrb[0].mxu0
    %178 = vdwg.mxu0
    %vm179 = vcmask 523264
    %v181 = vsel %vm179, %v69, 0
    %v184 = vsel %vm179, %v70, 0
    %v187 = vsel %vm179, %v71, 0
    %v190 = vsel %vm179, %v72, 0
    %192 = vmatprep.subr.mxu0 0.0
    %193 = vmatpush1.msra.mxu0 %v73
    %194 = vmatprep.subr.mxu0 0.0
    %195 = vmatpush1.msra.mxu0 %v74
    %196 = vmatprep.subr.mxu0 0.0
    %197 = vmatpush1.msra.mxu0 %v75
    %198 = vmatprep.subr.mxu0 0.0
    %199 = vmatpush1.msra.mxu0 %v76
    %200 = vmatprep.subr.mxu0 0.0
    %201 = vmatpush1.msra.mxu0 %v77
    %202 = vmatprep.subr.mxu0 0.0
    %203 = vmatpush1.msra.mxu0 %v78
    %204 = vmatprep.subr.mxu0 0.0
    %205 = vmatpush1.msra.mxu0 %v79
    %206 = vmatprep.subr.mxu0 0.0
    %207 = vmatpush1.msra.mxu0 %v80
    %208 = vmatprep.subr.mxu0 0.0
    %209 = vmatpush1.msra.mxu0 0.0
    %210 = vmatprep.subr.mxu0 0.0
    %211 = vmatpush1.msra.mxu0 0.0
    %212 = vmatprep.subr.mxu0 0.0
    %213 = vmatpush1.msra.mxu0 0.0
    %214 = vmatprep.subr.mxu0 0.0
    %215 = vmatpush1.msra.mxu0 0.0
    %216 = vmatprep.subr.mxu0 0.0
    %217 = vmatpush1.msra.mxu0 0.0
    %218 = vmatprep.subr.mxu0 0.0
    %219 = vmatpush1.msra.mxu0 0.0
    %220 = vmatprep.subr.mxu0 0.0
    %221 = vmatpush1.msra.mxu0 0.0
    %222 = vmatprep.subr.mxu0 0.0
    %223 = vmatpush1.msra.mxu0 0.0
    %224 = vmatprep.subr.mxu0 0.0
    %225 = vmatpush1.msra.mxu0 0.0
    %226 = vmatprep.subr.mxu0 0.0
    %227 = vmatpush1.msra.mxu0 0.0
    %228 = vmatprep.subr.mxu0 0.0
    %229 = vmatpush1.msra.mxu0 0.0
    %230 = vmatprep.subr.mxu0 0.0
    %231 = vmatpush1.msra.mxu0 0.0
    %232 = vmatprep.subr.mxu0 0.0
    %233 = vmatpush1.msra.mxu0 0.0
    %234 = vmatprep.subr.mxu0 0.0
    %235 = vmatpush1.msra.mxu0 0.0
    %236 = vmatprep.subr.mxu0 0.0
    %237 = vmatpush1.msra.mxu0 0.0
    %238 = vmatprep.subr.mxu0 0.0
    %239 = vmatpush1.msra.mxu0 0.0
    %240 = vmatprep.subr.mxu0 0.0
    %241 = vmatpush1.msra.mxu0 0.0
    %242 = vmatprep.subr.mxu0 0.0
    %243 = vmatpush1.msra.mxu0 0.0
    %244 = vmatprep.subr.mxu0 0.0
    %245 = vmatpush1.msra.mxu0 0.0
    %246 = vmatprep.subr.mxu0 0.0
    %247 = vmatpush1.msra.mxu0 0.0
    %248 = vmatprep.subr.mxu0 0.0
    %249 = vmatpush1.msra.mxu0 0.0
    %250 = vmatprep.subr.mxu0 0.0
    %251 = vmatpush1.msra.mxu0 0.0
    %252 = vmatprep.subr.mxu0 0.0
    %253 = vmatpush1.msra.mxu0 0.0
    %254 = vmatprep.subr.mxu0 0.0
    %255 = vmatpush1.msra.mxu0 0.0
    %256 = vmatprep.mubr.f32.mxu0 0.0
    %257 = vmatmul.mubr.f32.gmra.mrb[0].mxu0 %v181
    %v258 = vpop.f32.mrb[0].mxu0
    %v259 = vadd.f32 %v161, %v258
    %v260 = vpop.f32.mrb[0].mxu0
    %261 = vmatprep.mubr.f32.mxu0 0.0
    %262 = vmatmul.mubr.f32.gmra.mrb[0].mxu0 %v184
    %v263 = vpop.f32.mrb[0].mxu0
    %v264 = vadd.f32 %v166, %v263
    %v265 = vpop.f32.mrb[0].mxu0
    %266 = vmatprep.mubr.f32.mxu0 0.0
    %267 = vmatmul.mubr.f32.gmra.mrb[0].mxu0 %v187
    %v268 = vpop.f32.mrb[0].mxu0
    %v269 = vadd.f32 %v171, %v268
    %v270 = vpop.f32.mrb[0].mxu0
    %271 = vmatprep.mubr.f32.mxu0 0.0
    %272 = vmatmul.mubr.f32.gmra.mrb[0].mxu0 %v190
    %v273 = vpop.f32.mrb[0].mxu0
    %v274 = vadd.f32 %v176, %v273
    %v275 = vpop.f32.mrb[0].mxu0
    %276 = vdwg.mxu0
    %v277 = vmax.f32 %v259, 0.0
    %v278 = vmax.f32 %v264, 0.0
    %v279 = vmax.f32 %v269, 0.0
    %v280 = vmax.f32 %v274, 0.0
    %v281 = vadd.f32 %v277, %v278
    %v282 = vadd.f32 %v281, %v279
    %v283 = vadd.f32 %v282, %v280
    %v284 = vrot.slane %v283, 4
    %v285 = vadd.f32 %v283, %v284
    %v286 = vrot.slane %v285, 2
    %v287 = vadd.f32 %v285, %v286
    %v288 = vrot.slane %v287, 1
    %v289 = vadd.f32 %v287, %v288
    %v290 = vmul.f32 %v289, 0.03125
    %v291 = vsub.f32 %v277, %v290
    %v292 = vsub.f32 %v278, %v290
    %v293 = vsub.f32 %v279, %v290
    %v294 = vsub.f32 %v280, %v290
    %v295 = vmul.f32 %v291, %v291
    %v296 = vmul.f32 %v292, %v292
    %v297 = vmul.f32 %v293, %v293
    %v298 = vmul.f32 %v294, %v294
    %v299 = vadd.f32 %v295, %v296
    %v300 = vadd.f32 %v299, %v297
    %v301 = vadd.f32 %v300, %v298
    %v302 = vrot.slane %v301, 4
    %v303 = vadd.f32 %v301, %v302
    %v304 = vrot.slane %v303, 2
    %v305 = vadd.f32 %v303, %v304
    %v306 = vrot.slane %v305, 1
    %v307 = vadd.f32 %v305, %v306
    %v308 = vmul.f32 %v307, 0.03125
    %v309 = vadd.f32 %v308, 1e-05
    %v310 = vrsqrt.pop %v309
    %v311 = vmul.f32 %v291, %v310
    %v312 = vmul.f32 %v292, %v310
    %v313 = vmul.f32 %v293, %v310
    %v314 = vmul.f32 %v294, %v310
    %315 = vset.pattern.permute.xlu0 8
    %316 = vperm.xlu0 %315, %v65
    %v317 = vpop.permute.xlu0 %316
    %319 = vset.pattern.permute.xlu0 8
    %320 = vperm.xlu0 %319, %v66
    %v321 = vpop.permute.xlu0 %320
    %323 = vset.pattern.permute.xlu0 8
    %324 = vperm.xlu0 %323, %v67
    %v325 = vpop.permute.xlu0 %324
    %327 = vset.pattern.permute.xlu0 8
    %328 = vperm.xlu0 %327, %v68
    %v329 = vpop.permute.xlu0 %328
    %v331 = vmul.f32 %v311, %v317
    %v332 = vmul.f32 %v312, %v321
    %v333 = vmul.f32 %v313, %v325
    %v334 = vmul.f32 %v314, %v329
    %v335 = vadd.f32 %v331, %v332
    %v336 = vadd.f32 %v335, %v333
    %v337 = vadd.f32 %v336, %v334
    %v338 = vrot.slane %v337, 4
    %v339 = vadd.f32 %v337, %v338
    %v340 = vrot.slane %v339, 2
    %v341 = vadd.f32 %v339, %v340
    %v342 = vrot.slane %v341, 1
    %v343 = vadd.f32 %v341, %v342
    %344 = vset.pattern.permute.xlu0 9
    %345 = vperm.xlu0 %344, %v65
    %v346 = vpop.permute.xlu0 %345
    %v348 = vadd.f32 %v343, %v346
    %349 = vst [vmem:[#allocation5] sm:$0x1] %v348
    // Predicated region
    $region22: #{tpu_custom_call.1} parent=1 // pred_check
      _
    $region23: #{tpu_custom_call.1} parent=1 // pred_check_branch
      %351 = sbr.rel (0) target = $region25
    $region24: #{tpu_custom_call.1} parent=1 // pred_region
      %s353 = ssub.s32 16, 16
      %354 = vsyncadd [#allocation4], %s353
      %s356 = sshll.u32 [#allocation5], 4
      %s357 = int_to_ptr.vmem [resolvable:$true] %s356
      %359 = dma.vmem_to_hbm [thread:$0]  %s357, 16, %s4, [#allocation4]
    $region25: #{tpu_custom_call.1} parent=1 // pred_fallthru
      _
    // Predicated region
    $region26: #{tpu_custom_call.1} parent=1 // pred_check
      _
    $region27: #{tpu_custom_call.1} parent=1 // pred_check_branch
      %361 = sbr.rel (0) target = $region29
    $region28: #{tpu_custom_call.1} parent=1 // pred_region
      %362 = dma.done [#allocation4], 16
    $region29: #{tpu_custom_call.1} parent=1 // pred_fallthru
      _
    %363 = vsyncpa [#allocation3], 1
    %364 = vsyncpa [#allocation4], 1

</llo_original>
